<compile_context>
chip_gen: v5e
topology: v5e:2x2
jax: 0.10.0
libtpu: 0.0.40
codegen_flags: <defaults>
</compile_context>

<pallas_src>
import functools

import jax
import jax.numpy as jnp
from jax.experimental import pallas as pl
from jax.experimental.pallas import tpu as pltpu

# ------------------------- model hyper-parameters ---------------------------
NUM_CLASSES = 19          # cityscapes semantic classes
NUM_QUERIES = 8           # small synthetic query count
HIDDEN = 32               # query / pixel-feature dim
C_IN = 3                  # BGR image channels
H = W = 16                # small spatial size

# Max pixels per grid step (multiple of 128).  Double-buffered in/out tiles at
# 8192 are ~1.4 MiB, comfortably inside v7x's 32 MiB scoped VMEM; at the toy
# size (HW=256) this collapses to a single grid step.
MAX_TILE_HW = 8192


def _round_up(x, m):
    return (x + m - 1) // m * m


# ----------------------------- Pallas kernel --------------------------------
def _sem_seg_kernel(imgT_ref, weffT_ref, beffT_ref, probsT_ref, semT_ref):
    """Fused semantic-inference hot path for one HW tile (HW on the lane axis).

       mT[q, hw]   = W_eff^T[q, c] @ imgT[c, hw] + b_eff^T[q, 1]
       semT[k, hw] = probsT[k, q] @ sigmoid(mT)[q, hw]
    """
    mT = jnp.dot(weffT_ref[...], imgT_ref[...],
                 preferred_element_type=jnp.float32) + beffT_ref[...]
    semT_ref[...] = jnp.dot(probsT_ref[...], jax.nn.sigmoid(mT),
                            preferred_element_type=jnp.float32)


# ------------------------------- wrapper -------------------------------------
def init_params(key):
    k = jax.random.split(key, 5)
    return {
        "w_pix": jax.random.normal(k[0], (C_IN, HIDDEN), jnp.float32) * 0.2,
        "b_pix": jax.random.normal(k[1], (1, HIDDEN), jnp.float32) * 0.01,
        "queries": jax.random.normal(k[2], (NUM_QUERIES, HIDDEN), jnp.float32) * 0.2,
        "w_cls": jax.random.normal(k[3], (HIDDEN, NUM_CLASSES + 1), jnp.float32) * 0.2,
        "b_cls": jax.random.normal(k[4], (1, NUM_CLASSES + 1), jnp.float32) * 0.01,
        "pixel_mean": jnp.array([103.53, 116.28, 123.675], jnp.float32),  # BGR
        "pixel_std": jnp.array([57.375, 57.12, 58.395], jnp.float32),
    }


def _fold_params(params):
    """Parameter-only algebraic folds (normalization + 1x1 conv + mask head,
    plus the tiny class-head softmax).  All O(1); no image-sized work here."""
    inv_std = 1.0 / params["pixel_std"]                              # [3]
    qT = params["queries"].T                                         # [D, Nq]
    w_norm = params["w_pix"] * inv_std[:, None]                      # [3, D]
    b_norm = (params["b_pix"]
              - (params["pixel_mean"] * inv_std)[None, :] @ params["w_pix"])  # [1, D]
    w_eff_T = (w_norm @ qT).T                                        # [Nq, 3]
    b_eff_T = (b_norm @ qT).T                                        # [Nq, 1]

    logits = params["queries"] @ params["w_cls"] + params["b_cls"]   # [Nq, C+1]
    probs_T = jax.nn.softmax(logits, axis=-1)[:, :NUM_CLASSES].T     # [C, Nq]
    return w_eff_T, b_eff_T, probs_T


@jax.jit
def sem_seg_oneformer(image, params):
    """image: [H, W, 3] float32 BGR image.  Returns sem_seg: [C, H, W]."""
    h, w, _ = image.shape
    hw = h * w
    tile_hw = min(_round_up(hw, 128), MAX_TILE_HW)
    hw_pad = _round_up(hw, tile_hw)

    w_eff_T, b_eff_T, probs_T = _fold_params(params)

    # Channels-first, spatially-flattened image so HW sits on the lane axis.
    imgT = image.astype(jnp.float32).reshape(hw, C_IN).T             # [3, HW]
    if hw_pad != hw:
        imgT = jnp.pad(imgT, ((0, 0), (0, hw_pad - hw)))

    semT = pl.pallas_call(
        _sem_seg_kernel,
        out_shape=jax.ShapeDtypeStruct((NUM_CLASSES, hw_pad), jnp.float32),
        grid=(hw_pad // tile_hw,),
        in_specs=[
            pl.BlockSpec((C_IN, tile_hw), lambda i: (0, i)),
            pl.BlockSpec((NUM_QUERIES, C_IN), lambda i: (0, 0)),
            pl.BlockSpec((NUM_QUERIES, 1), lambda i: (0, 0)),
            pl.BlockSpec((NUM_CLASSES, NUM_QUERIES), lambda i: (0, 0)),
        ],
        out_specs=pl.BlockSpec((NUM_CLASSES, tile_hw), lambda i: (0, i)),
        compiler_params=pltpu.CompilerParams(
            dimension_semantics=("parallel",)),
    )(imgT, w_eff_T, b_eff_T, probs_T)

    # Already in [C, HW] order -> just reshape (drop lane padding if any).
    return semT[:, :hw].reshape(NUM_CLASSES, h, w)


# ------------------------------ reference ------------------------------------
def sem_seg_reference(image, params):
    h, w, _ = image.shape
    img = (image.astype(jnp.float32).reshape(-1, C_IN)
           - params["pixel_mean"]) / params["pixel_std"]
    f = img @ params["w_pix"] + params["b_pix"]
    logits = params["queries"] @ params["w_cls"] + params["b_cls"]
    probs = jax.nn.softmax(logits, axis=-1)[:, :NUM_CLASSES]
    masks = jax.nn.sigmoid(f @ params["queries"].T)
    sem = masks @ probs
    return sem.reshape(h, w, NUM_CLASSES).transpose(2, 0, 1)


if __name__ == "__main__":
    key = jax.random.PRNGKey(0)
    # synthetic BGR image in [0, 255)
    image = jax.random.uniform(key, (H, W, C_IN), jnp.float32,
                               minval=0.0, maxval=255.0)
    params = init_params(jax.random.PRNGKey(42))

    sem_seg = sem_seg_oneformer(image, params)
    sem_seg = jax.block_until_ready(sem_seg)

    ref = sem_seg_reference(image, params)
    assert sem_seg.shape == (NUM_CLASSES, H, W)
    assert jnp.allclose(sem_seg, ref, atol=1e-4, rtol=1e-4)
    print("KERNEL_OK")
</pallas_src>

<mosaic_0001>
module attributes {stable_mosaic.version = 11 : i64} {
  func.func @_sem_seg_kernel(%arg0: i32, %arg1: memref<3x256xf32, #tpu.memory_space<vmem>>, %arg2: memref<8x3xf32, #tpu.memory_space<vmem>>, %arg3: memref<8x1xf32, #tpu.memory_space<vmem>>, %arg4: memref<19x8xf32, #tpu.memory_space<vmem>>, %arg5: memref<19x256xf32, #tpu.memory_space<vmem>>) attributes {dimension_semantics = [#tpu.dimension_semantics<parallel>], iteration_bounds = array<i64: 1>, scalar_prefetch = 0 : i64, scratch_operands = 0 : i64, tpu.core_type = #tpu.core_type<tc>, window_params = [{transform_indices = @transform_0, window_bounds = array<i64: 3, 256>}, {pipeline_mode = #tpu.pipeline_mode<synchronous>, transform_indices = @transform_1, window_bounds = array<i64: 8, 3>}, {pipeline_mode = #tpu.pipeline_mode<synchronous>, transform_indices = @transform_2, window_bounds = array<i64: 8, 1>}, {pipeline_mode = #tpu.pipeline_mode<synchronous>, transform_indices = @transform_3, window_bounds = array<i64: 19, 8>}, {transform_indices = @transform_4, window_bounds = array<i64: 19, 256>}]} {
    %c0 = arith.constant 0 : index
    %c0_0 = arith.constant 0 : index
    %0 = vector.load %arg2[%c0, %c0_0] : memref<8x3xf32, #tpu.memory_space<vmem>>, vector<8x3xf32>
    %c0_1 = arith.constant 0 : index
    %c0_2 = arith.constant 0 : index
    %1 = vector.load %arg1[%c0_1, %c0_2] : memref<3x256xf32, #tpu.memory_space<vmem>>, vector<3x256xf32>
    %cst = arith.constant dense<0.000000e+00> : vector<8x256xf32>
    %2 = tpu.matmul %0, %1, %cst {dimension_numbers = #tpu.dot_dimension_numbers<[1], [0], [0], [1], [0, 0, 1, 1], [], []>} : vector<8x3xf32>, vector<3x256xf32>, vector<8x256xf32> -> vector<8x256xf32>
    %c0_3 = arith.constant 0 : index
    %c0_4 = arith.constant 0 : index
    %3 = vector.load %arg3[%c0_3, %c0_4] : memref<8x1xf32, #tpu.memory_space<vmem>>, vector<8x1xf32>
    %4 = vector.broadcast %3 : vector<8x1xf32> to vector<8x256xf32>
    %5 = arith.addf %2, %4 : vector<8x256xf32>
    %c0_5 = arith.constant 0 : index
    %c0_6 = arith.constant 0 : index
    %6 = vector.load %arg4[%c0_5, %c0_6] : memref<19x8xf32, #tpu.memory_space<vmem>>, vector<19x8xf32>
    %7 = arith.negf %5 : vector<8x256xf32>
    %8 = math.exp %7 : vector<8x256xf32>
    %cst_7 = arith.constant 1.000000e+00 : f32
    %9 = vector.broadcast %cst_7 : f32 to vector<8x256xf32>
    %10 = arith.addf %9, %8 : vector<8x256xf32>
    %11 = arith.divf %9, %10 : vector<8x256xf32>
    %cst_8 = arith.constant dense<0.000000e+00> : vector<19x256xf32>
    %12 = tpu.matmul %6, %11, %cst_8 {dimension_numbers = #tpu.dot_dimension_numbers<[1], [0], [0], [1], [0, 0, 1, 1], [], []>} : vector<19x8xf32>, vector<8x256xf32>, vector<19x256xf32> -> vector<19x256xf32>
    %c0_9 = arith.constant 0 : index
    %c0_10 = arith.constant 0 : index
    %13 = vector.load %arg5[%c0_9, %c0_10] : memref<19x256xf32, #tpu.memory_space<vmem>>, vector<19x256xf32>
    tpu.vector_store %arg5[%c0_9, %c0_10], %12 {strides = array<i32>} : memref<19x256xf32, #tpu.memory_space<vmem>>, vector<19x256xf32>,
    return
  }
  func.func @transform_0(%arg0: i32) -> (i32, i32) {
    %c0_i32 = arith.constant 0 : i32
    %c0_i32_0 = arith.constant 0 : i32
    return %c0_i32, %arg0 : i32, i32
  }
  func.func @transform_1(%arg0: i32) -> (i32, i32) {
    %c0_i32 = arith.constant 0 : i32
    %c0_i32_0 = arith.constant 0 : i32
    %c0_i32_1 = arith.constant 0 : i32
    return %c0_i32, %c0_i32_0 : i32, i32
  }
  func.func @transform_2(%arg0: i32) -> (i32, i32) {
    %c0_i32 = arith.constant 0 : i32
    %c0_i32_0 = arith.constant 0 : i32
    %c0_i32_1 = arith.constant 0 : i32
    return %c0_i32, %c0_i32_0 : i32, i32
  }
  func.func @transform_3(%arg0: i32) -> (i32, i32) {
    %c0_i32 = arith.constant 0 : i32
    %c0_i32_0 = arith.constant 0 : i32
    %c0_i32_1 = arith.constant 0 : i32
    return %c0_i32, %c0_i32_0 : i32, i32
  }
  func.func @transform_4(%arg0: i32) -> (i32, i32) {
    %c0_i32 = arith.constant 0 : i32
    %c0_i32_0 = arith.constant 0 : i32
    return %c0_i32, %arg0 : i32, i32
  }
}

</mosaic_0001>

<llo_original>
// kernel: sem_seg_oneformer.1
$region0: #{sem_seg_oneformer.1}
  #allocation0 [shape = 'u32[]', space=smem, size = 0x4, offset = 0x4, fixed_abs, tag = 'smem constant byte address 0x4 - core index']
  #allocation1 [shape = 'u32[72,128]{1,0:T(1,128)}', space=vmem, size = 0x9000, scoped, tag = 'internal scratch']
  %s0 = inlined_call_operand.vmem [shape: f32[3,256], index: 0, kind: input, shape index: {}]
  %s1 = inlined_call_operand.vmem [shape: f32[8,3], index: 1, kind: input, shape index: {}]
  %s2 = inlined_call_operand.vmem [shape: f32[8,1], index: 2, kind: input, shape index: {}]
  %s3 = inlined_call_operand.vmem [shape: f32[19,8], index: 3, kind: input, shape index: {}]
  %s4 = inlined_call_operand.vmem [shape: f32[19,256], index: 4, kind: output, shape index: {}]
  %s5 = sld [smem:[#allocation0]]
  $region26: #{sem_seg_oneformer.1} parent=0
    _
  %s7 = ssub.s32 1, %s5
  %s8 = scalar_select 0, %s7, %s5
  // Predicated region
  $region2: #{sem_seg_oneformer.1} parent=0 // pred_check
    _
  $region3: #{sem_seg_oneformer.1} parent=0 // pred_check_branch
    %10 = sbr.rel (0) target = $region5
  $region4: #{sem_seg_oneformer.1} parent=0 // pred_region
    _
  $region5: #{sem_seg_oneformer.1} parent=0 // pred_fallthru
    _
  // Predicated region
  $region6: #{sem_seg_oneformer.1} parent=0 // pred_check
    _
  $region7: #{sem_seg_oneformer.1} parent=0 // pred_check_branch
    %12 = sbr.rel (0) target = $region9
  $region8: #{sem_seg_oneformer.1} parent=0 // pred_region
    _
  $region9: #{sem_seg_oneformer.1} parent=0 // pred_fallthru
    _
  // Predicated region
  $region10: #{sem_seg_oneformer.1} parent=0 // pred_check
    _
  $region11: #{sem_seg_oneformer.1} parent=0 // pred_check_branch
    %14 = sbr.rel (0) target = $region13
  $region12: #{sem_seg_oneformer.1} parent=0 // pred_region
    _
  $region13: #{sem_seg_oneformer.1} parent=0 // pred_fallthru
    _
  // Predicated region
  $region14: #{sem_seg_oneformer.1} parent=0 // pred_check
    _
  $region15: #{sem_seg_oneformer.1} parent=0 // pred_check_branch
    %16 = sbr.rel (0) target = $region17
  $region16: #{sem_seg_oneformer.1} parent=0 // pred_region
    _
  $region17: #{sem_seg_oneformer.1} parent=0 // pred_fallthru
    _
  %v17 = vld [vmem:[%s1] sm:$0xff]
  %v18 = vld [vmem:[%s0] sm:$0x77]
  %v19 = vld [vmem:[%s2] sm:$0xff]
  %21 = vset.pattern.permute.xlu0 0
  %22 = vperm.xlu0 %21, %v19
  %v23 = vpop.permute.xlu0 %22
  %26 = vst [vmem:[#allocation1] ss:$2 sm:$0xff] %v18
  %v27 = vld.sshfl [vmem:[#allocation1] sm:$0xff pattern:$0x75316420]
  %v28 = vld.sshfl [vmem:[#allocation1 + $0x8] sm:$0xff pattern:$0x75316420]
  %vm29 = vcmask 23552
  %v31 = vsel %vm29, %v17, 0
  %vm33 = vcmask 1042432
  %v34 = vsel %vm33, %v27, 0
  %v36 = vsel %vm33, %v28, 0
  %38 = vmatpush.msra.mxu0 0.0
  %39 = vmatpush.msra.mxu0 0.0
  %40 = vmatpush.msra.mxu0 0.0
  %41 = vmatpush.msra.mxu0 0.0
  %42 = vmatpush.msra.mxu0 0.0
  %43 = vmatpush.msra.mxu0 0.0
  %44 = vmatpush.msra.mxu0 0.0
  %45 = vmatpush.msra.mxu0 0.0
  %46 = vmatpush.msra.mxu0 0.0
  %47 = vmatpush.msra.mxu0 0.0
  %48 = vmatpush.msra.mxu0 0.0
  %49 = vmatpush.msra.mxu0 0.0
  %50 = vmatpush.msra.mxu0 0.0
  %51 = vmatpush.msra.mxu0 0.0
  %52 = vmatpush.msra.mxu0 0.0
  %53 = vmatpush.msra.mxu0 %v34
  %54 = vmatmul.f32.gmra.mxu0 %v31
  %v55 = vpop.f32.mrf.mxu0
  %v56 = vadd.f32 %v23, %v55
  %57 = vdwg.mxu0
  %58 = vmatpush.msra.mxu0 0.0
  %59 = vmatpush.msra.mxu0 0.0
  %60 = vmatpush.msra.mxu0 0.0
  %61 = vmatpush.msra.mxu0 0.0
  %62 = vmatpush.msra.mxu0 0.0
  %63 = vmatpush.msra.mxu0 0.0
  %64 = vmatpush.msra.mxu0 0.0
  %65 = vmatpush.msra.mxu0 0.0
  %66 = vmatpush.msra.mxu0 0.0
  %67 = vmatpush.msra.mxu0 0.0
  %68 = vmatpush.msra.mxu0 0.0
  %69 = vmatpush.msra.mxu0 0.0
  %70 = vmatpush.msra.mxu0 0.0
  %71 = vmatpush.msra.mxu0 0.0
  %72 = vmatpush.msra.mxu0 0.0
  %73 = vmatpush.msra.mxu0 %v36
  %74 = vmatmul.f32.gmra.mxu0 %v31
  %v75 = vpop.f32.mrf.mxu0
  %v76 = vadd.f32 %v23, %v75
  %77 = vdwg.mxu0
  %v78 = vld [vmem:[%s3] sm:$0xff]
  %v79 = vld [vmem:[%s3 + $0x8] sm:$0xff]
  %v80 = vld [vmem:[%s3 + $0x10] sm:$0x7]
  %v81 = vxor.u32 %v56, 2147483648
  %v82 = vxor.u32 %v76, 2147483648
  %v83 = vmul.f32 %v81, 1.442695
  %v84 = vpow.pop %v83
  %v85 = vmul.f32 %v82, 1.442695
  %v86 = vpow.pop %v85
  %v87 = vadd.f32 %v84, 1.0
  %v88 = vadd.f32 %v86, 1.0
  %v89 = vrcp.pop %v87
  %v90 = vmul.f32 %v87, %v89
  %v91 = vsub.f32 1.0, %v90
  %v92 = vmul.f32 %v89, %v91
  %v93 = vadd.f32 %v89, %v92
  %vm94 = vweird.f32 %v87
  %vm95 = vweird.f32 %v89
  %vm96 = vmor %vm94, %vm95
  %v97 = vsel %vm96, %v89, %v93
  %v98 = vand.u32 2147483647, %v87
  %vm99 = vcmp.eq.f32.partialorder %v98, 8.507059e+37
  %v100 = vand.u32 %v87, 2147483648
  %v101 = vor.u32 1.1754944e-38, %v100
  %v102 = vsel %vm99, %v101, %v97
  %v103 = vmul.f32 1.0, %v102
  %v104 = vrcp.pop %v88
  %v105 = vmul.f32 %v88, %v104
  %v106 = vsub.f32 1.0, %v105
  %v107 = vmul.f32 %v104, %v106
  %v108 = vadd.f32 %v104, %v107
  %vm109 = vweird.f32 %v88
  %vm110 = vweird.f32 %v104
  %vm111 = vmor %vm109, %vm110
  %v112 = vsel %vm111, %v104, %v108
  %v113 = vand.u32 2147483647, %v88
  %vm114 = vcmp.eq.f32.partialorder %v113, 8.507059e+37
  %v115 = vand.u32 %v88, 2147483648
  %v116 = vor.u32 1.1754944e-38, %v115
  %v117 = vsel %vm114, %v116, %v112
  %v118 = vmul.f32 1.0, %v117
  %vm119 = vcmask 64512
  %v121 = vsel %vm119, %v78, 0
  %v124 = vsel %vm119, %v79, 0
  %v127 = vsel %vm119, %v80, 0
  %129 = vmatpush.msra.mxu0 0.0
  %130 = vmatpush.msra.mxu0 0.0
  %131 = vmatpush.msra.mxu0 0.0
  %132 = vmatpush.msra.mxu0 0.0
  %133 = vmatpush.msra.mxu0 0.0
  %134 = vmatpush.msra.mxu0 0.0
  %135 = vmatpush.msra.mxu0 0.0
  %136 = vmatpush.msra.mxu0 0.0
  %137 = vmatpush.msra.mxu0 0.0
  %138 = vmatpush.msra.mxu0 0.0
  %139 = vmatpush.msra.mxu0 0.0
  %140 = vmatpush.msra.mxu0 0.0
  %141 = vmatpush.msra.mxu0 0.0
  %142 = vmatpush.msra.mxu0 0.0
  %143 = vmatpush.msra.mxu0 0.0
  %144 = vmatpush.msra.mxu0 %v103
  %145 = vmatmul.f32.gmra.mxu0 %v121
  %v146 = vpop.f32.mrf.mxu0
  %v147 = vadd.f32 0.0, %v146
  %148 = vmatmul.f32.gmra.mxu0 %v124
  %v149 = vpop.f32.mrf.mxu0
  %v150 = vadd.f32 0.0, %v149
  %151 = vmatmul.f32.gmra.mxu0 %v127
  %v152 = vpop.f32.mrf.mxu0
  %v153 = vadd.f32 0.0, %v152
  %154 = vdwg.mxu0
  %155 = vmatpush.msra.mxu0 0.0
  %156 = vmatpush.msra.mxu0 0.0
  %157 = vmatpush.msra.mxu0 0.0
  %158 = vmatpush.msra.mxu0 0.0
  %159 = vmatpush.msra.mxu0 0.0
  %160 = vmatpush.msra.mxu0 0.0
  %161 = vmatpush.msra.mxu0 0.0
  %162 = vmatpush.msra.mxu0 0.0
  %163 = vmatpush.msra.mxu0 0.0
  %164 = vmatpush.msra.mxu0 0.0
  %165 = vmatpush.msra.mxu0 0.0
  %166 = vmatpush.msra.mxu0 0.0
  %167 = vmatpush.msra.mxu0 0.0
  %168 = vmatpush.msra.mxu0 0.0
  %169 = vmatpush.msra.mxu0 0.0
  %170 = vmatpush.msra.mxu0 %v118
  %171 = vmatmul.f32.gmra.mxu0 %v121
  %v172 = vpop.f32.mrf.mxu0
  %v173 = vadd.f32 0.0, %v172
  %174 = vmatmul.f32.gmra.mxu0 %v124
  %v175 = vpop.f32.mrf.mxu0
  %v176 = vadd.f32 0.0, %v175
  %177 = vmatmul.f32.gmra.mxu0 %v127
  %v178 = vpop.f32.mrf.mxu0
  %v179 = vadd.f32 0.0, %v178
  %180 = vdwg.mxu0
  %181 = vst [vmem:[%s4] sm:$0xff] %v147
  %182 = vst [vmem:[%s4 + $0x8] sm:$0xff] %v173
  %183 = vst [vmem:[%s4 + $0x10] sm:$0xff] %v150
  %184 = vst [vmem:[%s4 + $0x18] sm:$0xff] %v176
  %185 = vst [vmem:[%s4 + $0x20] sm:$0x7] %v153
  %186 = vst [vmem:[%s4 + $0x28] sm:$0x7] %v179
  // Predicated region
  $region18: #{sem_seg_oneformer.1} parent=0 // pred_check
    _
  $region19: #{sem_seg_oneformer.1} parent=0 // pred_check_branch
    %188 = sbr.rel (0) target = $region21
  $region20: #{sem_seg_oneformer.1} parent=0 // pred_region
    _
  $region21: #{sem_seg_oneformer.1} parent=0 // pred_fallthru
    _
  // Predicated region
  $region22: #{sem_seg_oneformer.1} parent=0 // pred_check
    _
  $region23: #{sem_seg_oneformer.1} parent=0 // pred_check_branch
    %190 = sbr.rel (0) target = $region25
  $region24: #{sem_seg_oneformer.1} parent=0 // pred_region
    _
  $region25: #{sem_seg_oneformer.1} parent=0 // pred_fallthru
    _

</llo_original>
